<compile_context>
chip_gen: v7x
topology: tpu7x:2x2x1
jax: 0.10.0
libtpu: 0.0.40
codegen_flags: <defaults>
</compile_context>

<pallas_src>
import functools

import jax
import jax.numpy as jnp
from jax.experimental import pallas as pl
from jax.experimental.pallas import tpu as pltpu


def _mbstd_kernel(x_ref, o_ref, mu_ref, acc_ref, *, C, F, HW):
    """One grid step: a tile of Mt group slots with all G group members resident.

    x_ref  : (G, Mt, 1, C*HW)       input dtype (lane-dense: C*HW on lanes)
    o_ref  : (G, Mt, 1, (C+F)*HW)   input dtype
    mu_ref : (Mt, 1, C*HW)          float32 scratch
    acc_ref: (Mt, 1, C*HW)          float32 scratch
    """
    G, Mt, _, L = x_ref.shape           # L = C*HW
    c = C // F
    inv_g = 1.0 / G

    # Pass 1: lane-dense copy-through of x plus group-sum accumulation.  The
    # accumulator lives in a VMEM scratch ref, so live f32 state is one
    # (Mt, 1, L) buffer instead of a G-times-larger f32 copy of the block.
    # G is a tiny static trip count -> static unroll with static indexing
    # (equivalent to lax.fori_loop(..., unroll=True) for this trip count).
    acc_ref[...] = jnp.zeros_like(acc_ref)
    for g in range(G):
        xg = x_ref[g]                                   # (Mt, 1, L)
        o_ref[g, :, :, :L] = xg                         # unmasked wide store
        acc_ref[...] += xg.astype(jnp.float32)
    mu_ref[...] = acc_ref[...] * inv_g

    # Pass 2: accumulate squared deviations from the group mean (two-pass
    # variance -> no cancellation risk), still only one live f32 buffer.
    acc_ref[...] = jnp.zeros_like(acc_ref)
    for g in range(G):
        d = x_ref[g].astype(jnp.float32) - mu_ref[...]
        acc_ref[...] += d * d

    std = jnp.sqrt(acc_ref[...] * inv_g + 1e-8)         # (Mt, 1, L) f32

    # Per-(slot, f) mean over that f-block's contiguous c*HW lane segment,
    # then broadcast each f's scalar across its HW output lanes.
    stat = jnp.mean(std.reshape(Mt, F, c * HW), axis=-1, keepdims=True)  # (Mt,F,1)
    tail = jnp.broadcast_to(stat, (Mt, F, HW)).reshape(Mt, 1, F * HW)
    o_ref[:, :, :, L:] = jnp.broadcast_to(
        tail[None], (G, Mt, 1, F * HW)).astype(o_ref.dtype)


def minibatch_std_layer(x, group_size, num_channels=1):
    N, C, H, W = x.shape
    G = N if group_size is None else min(int(group_size), N)
    F = int(num_channels)
    if N % G != 0:
        raise ValueError(f"batch size {N} must be divisible by group size {G}")
    if C % F != 0:
        raise ValueError(f"channels {C} must be divisible by num_channels {F}")
    M = N // G
    HW = H * W
    L = C * HW                         # lane width of the copy-through slab
    Lout = (C + F) * HW
    isz = jnp.dtype(x.dtype).itemsize

    # Lane-dense, row-major (free) views: sample n = g*M + m, with (C, H, W)
    # flattened onto the lane axis.
    x4 = x.reshape(G, M, 1, L)

    # ---- generation-aware VMEM budgeting -----------------------------------
    try:
        vmem_cap = int(pltpu.get_tpu_info().vmem_capacity_bytes)
    except Exception:                                  # robust off-TPU / older runtimes
        vmem_cap = 64 << 20                            # v7x per-TensorCore (smallest)
    budget = min(vmem_cap // 2, 48 << 20)              # bytes allowed for blocks

    # Honest per-group-slot cost: double-buffered input + output blocks plus
    # the two f32 scratch buffers and headroom for in-kernel f32 temporaries.
    per_slot = 2 * G * (L + Lout) * isz + 4 * L * 4

    # Keep >= 2 grid steps when M > 1 so ("parallel",) shards across both v7x
    # TensorCores and the in/out double buffers actually overlap.
    cap = pl.cdiv(M, 2) if M > 1 else 1
    m_tile = max(1, min(cap, M, budget // per_slot))
    # TODO(synk): if a single slot exceeds the budget (per_slot > budget), split
    # the C*HW lane axis over a second "arbitrary" grid axis with partial-sum
    # scratch instead of emitting one oversized block.

    grid = (pl.cdiv(M, m_tile),)

    needed = (2 * G * m_tile * (L + Lout) * isz        # double-buffered I/O blocks
              + 2 * m_tile * L * 4                     # mu + acc f32 scratch
              + 2 * m_tile * L * 4)                    # f32 temporaries headroom
    vmem_limit = int(min(max(needed + (1 << 20), 16 << 20), (vmem_cap * 3) // 4))

    cost = pl.CostEstimate(
        flops=int(3 * N * C * HW),                     # sub, square, accumulate
        transcendentals=int(M * C * HW),               # one sqrt per reduced element
        bytes_accessed=int(N * (2 * C + F) * HW * isz))

    out4 = pl.pallas_call(
        functools.partial(_mbstd_kernel, C=C, F=F, HW=HW),
        out_shape=jax.ShapeDtypeStruct((G, M, 1, Lout), x.dtype),
        grid=grid,
        in_specs=[pl.BlockSpec((G, m_tile, 1, L), lambda i: (0, i, 0, 0))],
        out_specs=pl.BlockSpec((G, m_tile, 1, Lout), lambda i: (0, i, 0, 0)),
        scratch_shapes=[pltpu.VMEM((m_tile, 1, L), jnp.float32),
                        pltpu.VMEM((m_tile, 1, L), jnp.float32)],
        compiler_params=pltpu.CompilerParams(
            dimension_semantics=("parallel",),
            vmem_limit_bytes=vmem_limit),
        cost_estimate=cost,
    )(x4)

    return out4.reshape(N, C + F, H, W)


def _reference(x, group_size, num_channels=1):
    # Pure-JAX reference mirroring the PyTorch forward exactly.
    N, C, H, W = x.shape
    G = N if group_size is None else min(group_size, N)
    F = num_channels
    c = C // F
    y = x.reshape(G, -1, F, c, H, W)
    y = y - y.mean(axis=0)
    y = jnp.sqrt(jnp.square(y).mean(axis=0) + 1e-8)
    y = y.mean(axis=(2, 3, 4))
    y = y.reshape(-1, F, 1, 1)
    y = jnp.tile(y, (G, 1, H, W))
    return jnp.concatenate([x, y], axis=1)


if __name__ == "__main__":
    # MinibatchStdLayer(group_size=2, num_channels=1) has no learned parameters.
    group_size = 2
    num_channels = 1

    N, C, H, W = 4, 4, 16, 16
    key = jax.random.PRNGKey(0)
    x = jax.random.normal(key, (N, C, H, W), dtype=jnp.float32)

    out = minibatch_std_layer(x, group_size, num_channels)
    out = jax.block_until_ready(out)

    ref = _reference(x, group_size, num_channels)
    assert out.shape == (N, C + num_channels, H, W), out.shape
    assert out.dtype == x.dtype, out.dtype
    assert jnp.allclose(out, ref, atol=1e-5, rtol=1e-5), "mismatch vs reference"

    print("KERNEL_OK")
</pallas_src>

<mosaic_0001>
module attributes {stable_mosaic.version = 11 : i64} {
  func.func @_mbstd_kernel(%arg0: i32, %arg1: memref<2x1x1x1024xf32, #tpu.memory_space<vmem>>, %arg2: memref<2x1x1x1280xf32, #tpu.memory_space<vmem>>, %arg3: memref<1x1x1024xf32, #tpu.memory_space<vmem>>, %arg4: memref<1x1x1024xf32, #tpu.memory_space<vmem>>) attributes {dimension_semantics = [#tpu.dimension_semantics<parallel>], iteration_bounds = array<i64: 2>, scalar_prefetch = 0 : i64, scratch_operands = 2 : i64, tpu.core_type = #tpu.core_type<tc>, window_params = [{transform_indices = @transform_0, window_bounds = array<i64: 2, 1, 1, 1024>}, {transform_indices = @transform_1, window_bounds = array<i64: 2, 1, 1, 1280>}]} {
    %cst = arith.constant 0.000000e+00 : f32
    %0 = vector.broadcast %cst : f32 to vector<1x1x1024xf32>
    %c0 = arith.constant 0 : index
    %c0_0 = arith.constant 0 : index
    %c0_1 = arith.constant 0 : index
    %1 = vector.load %arg4[%c0, %c0_0, %c0_1] : memref<1x1x1024xf32, #tpu.memory_space<vmem>>, vector<1x1x1024xf32>
    tpu.vector_store %arg4[%c0, %c0_0, %c0_1], %0 {strides = array<i32>} : memref<1x1x1024xf32, #tpu.memory_space<vmem>>, vector<1x1x1024xf32>,
    %c0_2 = arith.constant 0 : index
    %c0_3 = arith.constant 0 : index
    %c0_4 = arith.constant 0 : index
    %c0_5 = arith.constant 0 : index
    %2 = vector.load %arg1[%c0_2, %c0_3, %c0_4, %c0_5] : memref<2x1x1x1024xf32, #tpu.memory_space<vmem>>, vector<1x1x1x1024xf32>
    %3 = vector.shape_cast %2 : vector<1x1x1x1024xf32> to vector<1x1x1024xf32>
    %c0_6 = arith.constant 0 : index
    %c0_7 = arith.constant 0 : index
    %c0_8 = arith.constant 0 : index
    %c0_9 = arith.constant 0 : index
    %4 = vector.load %arg2[%c0_6, %c0_7, %c0_8, %c0_9] : memref<2x1x1x1280xf32, #tpu.memory_space<vmem>>, vector<1x1x1x1024xf32>
    %5 = vector.shape_cast %4 : vector<1x1x1x1024xf32> to vector<1x1x1024xf32>
    %6 = vector.shape_cast %3 : vector<1x1x1024xf32> to vector<1x1x1x1024xf32>
    tpu.vector_store %arg2[%c0_6, %c0_7, %c0_8, %c0_9], %6 {strides = array<i32>} : memref<2x1x1x1280xf32, #tpu.memory_space<vmem>>, vector<1x1x1x1024xf32>,
    %c0_10 = arith.constant 0 : index
    %c0_11 = arith.constant 0 : index
    %c0_12 = arith.constant 0 : index
    %7 = vector.load %arg4[%c0_10, %c0_11, %c0_12] : memref<1x1x1024xf32, #tpu.memory_space<vmem>>, vector<1x1x1024xf32>
    %8 = arith.addf %7, %3 : vector<1x1x1024xf32>
    %c0_13 = arith.constant 0 : index
    %c0_14 = arith.constant 0 : index
    %c0_15 = arith.constant 0 : index
    %9 = vector.load %arg4[%c0_13, %c0_14, %c0_15] : memref<1x1x1024xf32, #tpu.memory_space<vmem>>, vector<1x1x1024xf32>
    tpu.vector_store %arg4[%c0_13, %c0_14, %c0_15], %8 {strides = array<i32>} : memref<1x1x1024xf32, #tpu.memory_space<vmem>>, vector<1x1x1024xf32>,
    %c1 = arith.constant 1 : index
    %c0_16 = arith.constant 0 : index
    %c0_17 = arith.constant 0 : index
    %c0_18 = arith.constant 0 : index
    %10 = vector.load %arg1[%c1, %c0_16, %c0_17, %c0_18] : memref<2x1x1x1024xf32, #tpu.memory_space<vmem>>, vector<1x1x1x1024xf32>
    %11 = vector.shape_cast %10 : vector<1x1x1x1024xf32> to vector<1x1x1024xf32>
    %c1_19 = arith.constant 1 : index
    %c0_20 = arith.constant 0 : index
    %c0_21 = arith.constant 0 : index
    %c0_22 = arith.constant 0 : index
    %12 = vector.load %arg2[%c1_19, %c0_20, %c0_21, %c0_22] : memref<2x1x1x1280xf32, #tpu.memory_space<vmem>>, vector<1x1x1x1024xf32>
    %13 = vector.shape_cast %12 : vector<1x1x1x1024xf32> to vector<1x1x1024xf32>
    %14 = vector.shape_cast %11 : vector<1x1x1024xf32> to vector<1x1x1x1024xf32>
    tpu.vector_store %arg2[%c1_19, %c0_20, %c0_21, %c0_22], %14 {strides = array<i32>} : memref<2x1x1x1280xf32, #tpu.memory_space<vmem>>, vector<1x1x1x1024xf32>,
    %c0_23 = arith.constant 0 : index
    %c0_24 = arith.constant 0 : index
    %c0_25 = arith.constant 0 : index
    %15 = vector.load %arg4[%c0_23, %c0_24, %c0_25] : memref<1x1x1024xf32, #tpu.memory_space<vmem>>, vector<1x1x1024xf32>
    %16 = arith.addf %15, %11 : vector<1x1x1024xf32>
    %c0_26 = arith.constant 0 : index
    %c0_27 = arith.constant 0 : index
    %c0_28 = arith.constant 0 : index
    %17 = vector.load %arg4[%c0_26, %c0_27, %c0_28] : memref<1x1x1024xf32, #tpu.memory_space<vmem>>, vector<1x1x1024xf32>
    tpu.vector_store %arg4[%c0_26, %c0_27, %c0_28], %16 {strides = array<i32>} : memref<1x1x1024xf32, #tpu.memory_space<vmem>>, vector<1x1x1024xf32>,
    %c0_29 = arith.constant 0 : index
    %c0_30 = arith.constant 0 : index
    %c0_31 = arith.constant 0 : index
    %18 = vector.load %arg4[%c0_29, %c0_30, %c0_31] : memref<1x1x1024xf32, #tpu.memory_space<vmem>>, vector<1x1x1024xf32>
    %cst_32 = arith.constant 5.000000e-01 : f32
    %19 = vector.broadcast %cst_32 : f32 to vector<1x1x1024xf32>
    %20 = arith.mulf %18, %19 : vector<1x1x1024xf32>
    %c0_33 = arith.constant 0 : index
    %c0_34 = arith.constant 0 : index
    %c0_35 = arith.constant 0 : index
    %21 = vector.load %arg3[%c0_33, %c0_34, %c0_35] : memref<1x1x1024xf32, #tpu.memory_space<vmem>>, vector<1x1x1024xf32>
    tpu.vector_store %arg3[%c0_33, %c0_34, %c0_35], %20 {strides = array<i32>} : memref<1x1x1024xf32, #tpu.memory_space<vmem>>, vector<1x1x1024xf32>,
    %cst_36 = arith.constant 0.000000e+00 : f32
    %22 = vector.broadcast %cst_36 : f32 to vector<1x1x1024xf32>
    %c0_37 = arith.constant 0 : index
    %c0_38 = arith.constant 0 : index
    %c0_39 = arith.constant 0 : index
    %23 = vector.load %arg4[%c0_37, %c0_38, %c0_39] : memref<1x1x1024xf32, #tpu.memory_space<vmem>>, vector<1x1x1024xf32>
    tpu.vector_store %arg4[%c0_37, %c0_38, %c0_39], %22 {strides = array<i32>} : memref<1x1x1024xf32, #tpu.memory_space<vmem>>, vector<1x1x1024xf32>,
    %c0_40 = arith.constant 0 : index
    %c0_41 = arith.constant 0 : index
    %c0_42 = arith.constant 0 : index
    %c0_43 = arith.constant 0 : index
    %24 = vector.load %arg1[%c0_40, %c0_41, %c0_42, %c0_43] : memref<2x1x1x1024xf32, #tpu.memory_space<vmem>>, vector<1x1x1x1024xf32>
    %25 = vector.shape_cast %24 : vector<1x1x1x1024xf32> to vector<1x1x1024xf32>
    %c0_44 = arith.constant 0 : index
    %c0_45 = arith.constant 0 : index
    %c0_46 = arith.constant 0 : index
    %26 = vector.load %arg3[%c0_44, %c0_45, %c0_46] : memref<1x1x1024xf32, #tpu.memory_space<vmem>>, vector<1x1x1024xf32>
    %27 = arith.subf %25, %26 : vector<1x1x1024xf32>
    %c0_47 = arith.constant 0 : index
    %c0_48 = arith.constant 0 : index
    %c0_49 = arith.constant 0 : index
    %28 = vector.load %arg4[%c0_47, %c0_48, %c0_49] : memref<1x1x1024xf32, #tpu.memory_space<vmem>>, vector<1x1x1024xf32>
    %29 = arith.mulf %27, %27 : vector<1x1x1024xf32>
    %30 = arith.addf %28, %29 : vector<1x1x1024xf32>
    %c0_50 = arith.constant 0 : index
    %c0_51 = arith.constant 0 : index
    %c0_52 = arith.constant 0 : index
    %31 = vector.load %arg4[%c0_50, %c0_51, %c0_52] : memref<1x1x1024xf32, #tpu.memory_space<vmem>>, vector<1x1x1024xf32>
    tpu.vector_store %arg4[%c0_50, %c0_51, %c0_52], %30 {strides = array<i32>} : memref<1x1x1024xf32, #tpu.memory_space<vmem>>, vector<1x1x1024xf32>,
    %c1_53 = arith.constant 1 : index
    %c0_54 = arith.constant 0 : index
    %c0_55 = arith.constant 0 : index
    %c0_56 = arith.constant 0 : index
    %32 = vector.load %arg1[%c1_53, %c0_54, %c0_55, %c0_56] : memref<2x1x1x1024xf32, #tpu.memory_space<vmem>>, vector<1x1x1x1024xf32>
    %33 = vector.shape_cast %32 : vector<1x1x1x1024xf32> to vector<1x1x1024xf32>
    %c0_57 = arith.constant 0 : index
    %c0_58 = arith.constant 0 : index
    %c0_59 = arith.constant 0 : index
    %34 = vector.load %arg3[%c0_57, %c0_58, %c0_59] : memref<1x1x1024xf32, #tpu.memory_space<vmem>>, vector<1x1x1024xf32>
    %35 = arith.subf %33, %34 : vector<1x1x1024xf32>
    %c0_60 = arith.constant 0 : index
    %c0_61 = arith.constant 0 : index
    %c0_62 = arith.constant 0 : index
    %36 = vector.load %arg4[%c0_60, %c0_61, %c0_62] : memref<1x1x1024xf32, #tpu.memory_space<vmem>>, vector<1x1x1024xf32>
    %37 = arith.mulf %35, %35 : vector<1x1x1024xf32>
    %38 = arith.addf %36, %37 : vector<1x1x1024xf32>
    %c0_63 = arith.constant 0 : index
    %c0_64 = arith.constant 0 : index
    %c0_65 = arith.constant 0 : index
    %39 = vector.load %arg4[%c0_63, %c0_64, %c0_65] : memref<1x1x1024xf32, #tpu.memory_space<vmem>>, vector<1x1x1024xf32>
    tpu.vector_store %arg4[%c0_63, %c0_64, %c0_65], %38 {strides = array<i32>} : memref<1x1x1024xf32, #tpu.memory_space<vmem>>, vector<1x1x1024xf32>,
    %c0_66 = arith.constant 0 : index
    %c0_67 = arith.constant 0 : index
    %c0_68 = arith.constant 0 : index
    %40 = vector.load %arg4[%c0_66, %c0_67, %c0_68] : memref<1x1x1024xf32, #tpu.memory_space<vmem>>, vector<1x1x1024xf32>
    %cst_69 = arith.constant 5.000000e-01 : f32
    %41 = vector.broadcast %cst_69 : f32 to vector<1x1x1024xf32>
    %42 = arith.mulf %40, %41 : vector<1x1x1024xf32>
    %cst_70 = arith.constant 9.99999993E-9 : f32
    %43 = vector.broadcast %cst_70 : f32 to vector<1x1x1024xf32>
    %44 = arith.addf %42, %43 : vector<1x1x1024xf32>
    %45 = math.sqrt %44 : vector<1x1x1024xf32>
    %cst_71 = arith.constant dense<0.000000e+00> : vector<1x1xf32>
    %46 = vector.multi_reduction <add>, %45, %cst_71 [2] : vector<1x1x1024xf32> to vector<1x1xf32>
    %47 = vector.shape_cast %46 : vector<1x1xf32> to vector<1x1x1xf32>
    %cst_72 = arith.constant 1.024000e+03 : f32
    %48 = vector.broadcast %cst_72 : f32 to vector<1x1x1xf32>
    %49 = arith.divf %47, %48 : vector<1x1x1xf32>
    %50 = vector.shape_cast %49 : vector<1x1x1xf32> to vector<1x1x1xf32>
    %51 = vector.broadcast %50 : vector<1x1x1xf32> to vector<1x1x256xf32>
    %52 = vector.shape_cast %51 : vector<1x1x256xf32> to vector<1x1x1x256xf32>
    %53 = vector.shape_cast %52 : vector<1x1x1x256xf32> to vector<1x1x1x256xf32>
    %54 = vector.broadcast %53 : vector<1x1x1x256xf32> to vector<2x1x1x256xf32>
    %c0_73 = arith.constant 0 : index
    %c0_74 = arith.constant 0 : index
    %c0_75 = arith.constant 0 : index
    %c1024 = arith.constant 1024 : index
    %55 = vector.load %arg2[%c0_73, %c0_74, %c0_75, %c1024] : memref<2x1x1x1280xf32, #tpu.memory_space<vmem>>, vector<2x1x1x256xf32>
    tpu.vector_store %arg2[%c0_73, %c0_74, %c0_75, %c1024], %54 {strides = array<i32>} : memref<2x1x1x1280xf32, #tpu.memory_space<vmem>>, vector<2x1x1x256xf32>,
    return
  }
  func.func @transform_0(%arg0: i32) -> (i32, i32, i32, i32) {
    %c0_i32 = arith.constant 0 : i32
    %c0_i32_0 = arith.constant 0 : i32
    %c0_i32_1 = arith.constant 0 : i32
    %c0_i32_2 = arith.constant 0 : i32
    return %c0_i32, %arg0, %c0_i32_0, %c0_i32_1 : i32, i32, i32, i32
  }
  func.func @transform_1(%arg0: i32) -> (i32, i32, i32, i32) {
    %c0_i32 = arith.constant 0 : i32
    %c0_i32_0 = arith.constant 0 : i32
    %c0_i32_1 = arith.constant 0 : i32
    %c0_i32_2 = arith.constant 0 : i32
    return %c0_i32, %arg0, %c0_i32_0, %c0_i32_1 : i32, i32, i32, i32
  }
}

</mosaic_0001>

<llo_original>
// kernel: tpu_custom_call.1
$region0: #{tpu_custom_call.1}
  #allocation0 [shape = 'u32[]', space=smem, size = 0x4, offset = 0x4, fixed_abs, tag = 'smem constant byte address 0x4 - core index']
  #allocation1 [shape = 'u32[144,128]{1,0:T(1,128)}', space=vmem, size = 0x12000, scoped, tag = 'internal scratch']
  #allocation2 [shape = 'f32[1,1,1024]{2,1,0:T(1,128)}', space=vmem, size = 0x1000, scoped, tag = 'scratch operand']
  #allocation3 [shape = 'f32[1,1,1024]{2,1,0:T(1,128)}', space=vmem, size = 0x1000, scoped, tag = 'scratch operand']
  %s0 = inlined_call_operand.hbm [shape: f32[2,2,1,1024], index: 0, kind: input, shape index: {}]
  %s1 = inlined_call_operand.hbm [shape: f32[2,2,1,1280], index: 1, kind: output, shape index: {}]
  %s2 = sld [smem:[#allocation0]]
  $region41: #{tpu_custom_call.1} parent=0
    _
  %s4 = ssub.s32 1, %s2
  %s5 = scalar_select 0, %s4, %s2
  $region1: #{tpu_custom_call.1} parent=0
    #allocation4 [shape = 'u8[16384]{0}', space=vmem, size = 0x4000, scoped, tag = 'input window, operand 0']
    #allocation5 [shape = 's32[2]{0}', space=sflag, size = 0x8, scoped, tag = 'scoped memory for tpu_custom_call.1']
    #allocation6 [shape = 's32[2]{0}', space=sflag, size = 0x8, scoped, tag = 'scoped memory for tpu_custom_call.1']
    #allocation7 [shape = 'u8[20480]{0}', space=vmem, size = 0x5000, scoped, tag = 'output window, operand 0']
    %6 = vsyncpa [#allocation5], 0
    %s7 = scalar_lea.sflag [#allocation5], 1
    %8 = vsyncpa %s7, 0
    %9 = vsyncpa [#allocation6], 0
    %s10 = scalar_lea.sflag [#allocation6], 1
    %11 = vsyncpa %s10, 0
    loop: start=0, step=1, limit=4
    $region2: #{tpu_custom_call.1} parent=1 // loop_pre_header
      _
    $region3: #{tpu_custom_call.1} parent=1 // loop_header
      %s13 = sphi 0, %s17
      %p14 = scmp.ge.s32.totalorder %s13, 4
      %s23 = sphi 0, %s25
      %s26 = sphi 0, %s23
      %s27 = sphi 0, %s26
      %s43 = sphi 0, %s27
      %s49 = sphi 0, %s51
      %s52 = sphi 0, %s49
      %s53 = sphi 0, %s52
      %s69 = sphi 0, %s53
    $region4: #{tpu_custom_call.1} parent=1 // loop_header_branch
      %16 = sbr.rel (%p14) target = $region8
    $region5: #{tpu_custom_call.1} parent=1 // loop_body
      %s18 = ssub.s32 %s13, 1
      %s19 = ssub.s32 %s13, 2
      %s20 = sadd.s32 %s13, 1
      %s21 = ssub.s32 %s13, %s20
      %p22 = scmp.eq.s32.totalorder %s21, 0
      %s24 = sadd.s32 %s23, 1
      %s25 = scalar_select %p22, %s23, %s24
      %p28 = pneg %p22
      %p29 = scmp.eq.s32.totalorder %s13, 1
      %p30 = por %p28, %p29
      %p31 = scmp.ne.s32.totalorder %s23, %s26
      %p32 = scmp.eq.s32.totalorder %s13, 0
      %p33 = por %p31, %p32
      %p34 = scmp.ne.s32.totalorder %s23, %s26
      %p35 = scmp.eq.s32.totalorder %s18, 1
      %p36 = por %p34, %p35
      %p37 = scmp.ne.s32.totalorder %s26, %s27
      %p38 = scmp.eq.s32.totalorder %s18, 0
      %p39 = por %p37, %p38
      %p40 = scmp.ne.s32.totalorder %s26, %s27
      %p41 = scmp.eq.s32.totalorder %s19, 1
      %p42 = por %p40, %p41
      %p44 = scmp.ne.s32.totalorder %s27, %s43
      %p45 = scmp.eq.s32.totalorder %s19, 0
      %p46 = por %p44, %p45
      %s47 = ssub.s32 %s13, %s20
      %p48 = scmp.eq.s32.totalorder %s47, 0
      %s50 = sadd.s32 %s49, 1
      %s51 = scalar_select %p48, %s49, %s50
      %p54 = pneg %p48
      %p55 = scmp.eq.s32.totalorder %s13, 1
      %p56 = por %p54, %p55
      %p57 = scmp.ne.s32.totalorder %s49, %s52
      %p58 = scmp.eq.s32.totalorder %s13, 0
      %p59 = por %p57, %p58
      %p60 = scmp.ne.s32.totalorder %s49, %s52
      %p61 = scmp.eq.s32.totalorder %s18, 1
      %p62 = por %p60, %p61
      %p63 = scmp.ne.s32.totalorder %s52, %s53
      %p64 = scmp.eq.s32.totalorder %s18, 0
      %p65 = por %p63, %p64
      %p66 = scmp.ne.s32.totalorder %s52, %s53
      %p67 = scmp.eq.s32.totalorder %s19, 1
      %p68 = por %p66, %p67
      %p70 = scmp.ne.s32.totalorder %s53, %s69
      %p71 = scmp.eq.s32.totalorder %s19, 0
      %p72 = por %p70, %p71
      %p73 = scmp.le.s32.totalorder 1, %s13
      %p74 = scmp.lt.s32.totalorder %s13, 3
      %p75 = pnand %p73, %p74
      %p76 = pneg %p75
      // Predicated region
      $region9: #{tpu_custom_call.1} parent=5 // pred_check
        _
      $region10: #{tpu_custom_call.1} parent=5 // pred_check_branch
        %78 = sbr.rel (%p75) target = $region12
      $region11: #{tpu_custom_call.1} parent=5 // pred_region
        %s79 = ssub.s32 %s13, 1
      $region12: #{tpu_custom_call.1} parent=5 // pred_fallthru
        _
      %p80 = scmp.lt.s32.totalorder %s13, 2
      // Predicated region
      $region13: #{tpu_custom_call.1} parent=5 // pred_check
        %p81 = pneg %p80
      $region14: #{tpu_custom_call.1} parent=5 // pred_check_branch
        %83 = sbr.rel (%p81) target = $region16
      $region15: #{tpu_custom_call.1} parent=5 // pred_region
        // Predicated region
        $region17: #{tpu_custom_call.1} parent=15 // pred_check
          %p84 = pneg %p33
        $region18: #{tpu_custom_call.1} parent=15 // pred_check_branch
          %86 = sbr.rel (%p84) target = $region20
        $region19: #{tpu_custom_call.1} parent=15 // pred_region
          %s87 = sand.u32 %s23, 1
          %s88 = scalar_lea.sflag [#allocation5], %s87
          %s89 = sand.u32 %s23, 1
          %s90 = smul.addr %s89, 16
          %s91 = scalar_lea.vmem [#allocation4], %s90
          %s93 = ssub.s32 256, 256
          %94 = vsyncadd %s88, %s93
          %s95 = smul.addr %s13, 8
          %s96 = smul.addr %s95, 16
          %s97 = scalar_lea.hbm %s0, %s96
          %s98 = sshll.u32 %s91, 4
          %s99 = int_to_ptr.vmem [resolvable:$true] %s98
          %104 = dma.hbm_to_vmem [thread:$0]  %s97, 256, %s99, %s88, 256, 128, 8
        $region20: #{tpu_custom_call.1} parent=15 // pred_fallthru
          _
      $region16: #{tpu_custom_call.1} parent=5 // pred_fallthru
        _
      %p105 = scmp.le.s32.totalorder 1, %s13
      %p106 = scmp.lt.s32.totalorder %s13, 3
      %p107 = pnand %p105, %p106
      %p108 = pneg %p107
      // Predicated region
      $region21: #{tpu_custom_call.1} parent=5 // pred_check
        _
      $region22: #{tpu_custom_call.1} parent=5 // pred_check_branch
        %110 = sbr.rel (%p107) target = $region24
      $region23: #{tpu_custom_call.1} parent=5 // pred_region
        %s111 = ssub.s32 %s13, 1
        %s112 = sand.u32 %s26, 1
        %s113 = scalar_lea.sflag [#allocation5], %s112
        %s114 = sand.u32 %s26, 1
        %s115 = smul.addr %s114, 16
        %s116 = scalar_lea.vmem [#allocation4], %s115
        // Predicated region
        $region25: #{tpu_custom_call.1} parent=23 // pred_check
          %p117 = pneg %p39
        $region26: #{tpu_custom_call.1} parent=23 // pred_check_branch
          %119 = sbr.rel (%p117) target = $region28
        $region27: #{tpu_custom_call.1} parent=23 // pred_region
          %120 = dma.done %s113, 256
        $region28: #{tpu_custom_call.1} parent=23 // pred_fallthru
          _
        %s121 = sand.u32 %s26, 1
        %s122 = scalar_lea.sflag [#allocation5], %s121
        %s123 = sand.u32 %s26, 1
        %s124 = smul.addr %s123, 16
        %s125 = scalar_lea.vmem [#allocation4], %s124
        %p126 = pneg %p39
        %p127 = pneg %p36
        %p128 = pneg %p65
        %p129 = pneg %p62
        %s130 = sand.u32 %s52, 1
        %s131 = scalar_lea.sflag [#allocation6], %s130
        %s132 = sand.u32 %s52, 1
        %s133 = smul.addr %s132, 20
        %s134 = scalar_lea.vmem [#allocation7], %s133
        %135 = vst [vmem:[#allocation3] sm:$0xff] 0.0
        %v136 = vld [vmem:[%s116] sm:$0xff]
        %137 = vst [vmem:[%s134] sm:$0xff] %v136
        %v138 = vld [vmem:[#allocation3] sm:$0xff]
        %v139 = vadd.f32 %v138, %v136
        %140 = vst [vmem:[#allocation3] sm:$0xff] %v139
        %s141 = scalar_lea.vmem %s116, 8 [#allocation4]
        %v142 = vld [vmem:[%s141] sm:$0xff]
        %s143 = scalar_lea.vmem %s134, 10 [#allocation7]
        %144 = vst [vmem:[%s143] sm:$0xff] %v142
        %v145 = vld [vmem:[#allocation3] sm:$0xff]
        %v146 = vadd.f32 %v145, %v142
        %147 = vst [vmem:[#allocation3] sm:$0xff] %v146
        %v148 = vld [vmem:[#allocation3] sm:$0xff]
        %v149 = vmul.f32 %v148, 0.5
        %150 = vst [vmem:[#allocation2] sm:$0xff] %v149
        %151 = vst [vmem:[#allocation3] sm:$0xff] 0.0
        %v152 = vld [vmem:[%s116] sm:$0xff]
        %v153 = vld [vmem:[#allocation2] sm:$0xff]
        %v154 = vsub.f32 %v152, %v153
        %v155 = vld [vmem:[#allocation3] sm:$0xff]
        %v156 = vmul.f32 %v154, %v154
        %v157 = vadd.f32 %v155, %v156
        %158 = vst [vmem:[#allocation3] sm:$0xff] %v157
        %v159 = vld [vmem:[%s141] sm:$0xff]
        %v160 = vld [vmem:[#allocation2] sm:$0xff]
        %v161 = vsub.f32 %v159, %v160
        %v162 = vld [vmem:[#allocation3] sm:$0xff]
        %v163 = vmul.f32 %v161, %v161
        %v164 = vadd.f32 %v162, %v163
        %165 = vst [vmem:[#allocation3] sm:$0xff] %v164
        %v166 = vld [vmem:[#allocation3] sm:$0xff]
        %v167 = vmul.f32 %v166, 0.5
        %v168 = vadd.f32 %v167, 1e-08
        %v169 = vrsqrt.pop %v168
        %v170 = vmul.f32 %v168, %v169
        %vm171 = vcmp.eq.f32.partialorder %v168, inf
        %v172 = vsel %vm171, %v168, %v170
        %vm173 = vcmp.eq.f32.partialorder %v168, 0.0
        %v174 = vand.u32 %v168, 2147483648
        %v175 = vsel %vm173, %v174, %v172
        %v177 = vlaneseq
        %v178 = vshrl.u32 %v177, 7
        %v179 = vsub.s32 0, %v178
        %v180 = vrot.slane %v175, %v179
        %v181 = vlaneseq
        %v182 = vshrl.u32 %v181, 7
        %v183 = vsub.s32 1, %v182
        %v184 = vrot.slane %v175, %v183
        %v185 = vlaneseq
        %v186 = vshrl.u32 %v185, 7
        %v187 = vsub.s32 2, %v186
        %v188 = vrot.slane %v175, %v187
        %v189 = vlaneseq
        %v190 = vshrl.u32 %v189, 7
        %v191 = vsub.s32 3, %v190
        %v192 = vrot.slane %v175, %v191
        %v193 = vlaneseq
        %v194 = vshrl.u32 %v193, 7
        %v195 = vsub.s32 4, %v194
        %v196 = vrot.slane %v175, %v195
        %v197 = vlaneseq
        %v198 = vshrl.u32 %v197, 7
        %v199 = vsub.s32 5, %v198
        %v200 = vrot.slane %v175, %v199
        %v201 = vlaneseq
        %v202 = vshrl.u32 %v201, 7
        %v203 = vsub.s32 6, %v202
        %v204 = vrot.slane %v175, %v203
        %v205 = vlaneseq
        %v206 = vshrl.u32 %v205, 7
        %v207 = vsub.s32 7, %v206
        %v208 = vrot.slane %v175, %v207
        %vm217 = vcmask 1040384
        %v218 = vsel %vm217, %v180, 0.0
        %v219 = vsel %vm217, %v184, 0.0
        %v220 = vadd.f32 %v218, %v219
        %v221 = vsel %vm217, %v188, 0.0
        %v222 = vadd.f32 %v220, %v221
        %v223 = vsel %vm217, %v192, 0.0
        %v224 = vadd.f32 %v222, %v223
        %v225 = vsel %vm217, %v196, 0.0
        %v226 = vadd.f32 %v224, %v225
        %v227 = vsel %vm217, %v200, 0.0
        %v228 = vadd.f32 %v226, %v227
        %v229 = vsel %vm217, %v204, 0.0
        %v230 = vadd.f32 %v228, %v229
        %v231 = vsel %vm217, %v208, 0.0
        %v232 = vadd.f32 %v230, %v231
        %233 = vadd.xlane.f32.xlu0 %v232
        %v234 = vpop.xlane.xlu0 %233
        %v235 = vrcp.pop 1024.0
        %v236 = vmul.f32 %v234, %v235
        %v238 = vlaneseq
        %v239 = vshrl.u32 %v238, 7
        %v240 = vsub.s32 0, %v239
        %v241 = vrot.slane %v236, %v240
        %v243 = vlaneseq
        %vm244 = vcmp.ge.s32.totalorder %v243, 0
        %vm245 = vcmp.lt.s32.totalorder %v243, 256
        %vm246 = vmand %vm244, %vm245
        %247 = vst.msk [vmem:[%s134 + $0x8] sm:$0x3] %vm246, %v241
        %248 = vst.msk [vmem:[%s134 + $0x12] sm:$0x3] %vm246, %v241
        %s249 = sand.u32 %s52, 1
        %s250 = scalar_lea.sflag [#allocation6], %s249
        %s251 = sand.u32 %s52, 1
        %s252 = smul.addr %s251, 20
        %s253 = scalar_lea.vmem [#allocation7], %s252
        // Predicated region
        $region29: #{tpu_custom_call.1} parent=23 // pred_check
          %p254 = pneg %p62
        $region30: #{tpu_custom_call.1} parent=23 // pred_check_branch
          %256 = sbr.rel (%p254) target = $region32
        $region31: #{tpu_custom_call.1} parent=23 // pred_region
          %s258 = ssub.s32 320, 320
          %259 = vsyncadd %s250, %s258
          %s260 = smul.addr %s18, 10
          %s261 = smul.addr %s260, 16
          %s262 = scalar_lea.hbm %s1, %s261
          %s263 = sshll.u32 %s253, 4
          %s264 = int_to_ptr.vmem [resolvable:$true] %s263
          %269 = dma.vmem_to_hbm [thread:$0]  %s264, 320, %s262, %s250, 160, 320, 10
        $region32: #{tpu_custom_call.1} parent=23 // pred_fallthru
          _
      $region24: #{tpu_custom_call.1} parent=5 // pred_fallthru
        _
      %p270 = scmp.le.s32.totalorder 2, %s13
      // Predicated region
      $region33: #{tpu_custom_call.1} parent=5 // pred_check
        %p271 = pneg %p270
      $region34: #{tpu_custom_call.1} parent=5 // pred_check_branch
        %273 = sbr.rel (%p271) target = $region36
      $region35: #{tpu_custom_call.1} parent=5 // pred_region
        %s274 = ssub.s32 %s13, 2
        // Predicated region
        $region37: #{tpu_custom_call.1} parent=35 // pred_check
          %p275 = pneg %p68
        $region38: #{tpu_custom_call.1} parent=35 // pred_check_branch
          %277 = sbr.rel (%p275) target = $region40
        $region39: #{tpu_custom_call.1} parent=35 // pred_region
          %s278 = sand.u32 %s53, 1
          %s279 = scalar_lea.sflag [#allocation6], %s278
          %s280 = sand.u32 %s53, 1
          %s281 = smul.addr %s280, 20
          %s282 = scalar_lea.vmem [#allocation7], %s281
          %283 = dma.done %s279, 320
        $region40: #{tpu_custom_call.1} parent=35 // pred_fallthru
          _
      $region36: #{tpu_custom_call.1} parent=5 // pred_fallthru
        _
    $region6: #{tpu_custom_call.1} parent=1 // loop_footer
      %s17 = sadd.s32 1, %s13
    $region7: #{tpu_custom_call.1} parent=1 // loop_footer_branch
      %12 = sbr.rel target = $region3
    $region8: #{tpu_custom_call.1} parent=1 // loop_exit
      _
    %284 = vsyncpa [#allocation5], 1
    %s285 = scalar_lea.sflag [#allocation5], 1
    %286 = vsyncpa %s285, 1
    %287 = vsyncpa [#allocation6], 1
    %s288 = scalar_lea.sflag [#allocation6], 1
    %289 = vsyncpa %s288, 1

</llo_original>
